<compile_context>
chip_gen: v7x
topology: tpu7x:2x2x1
jax: 0.10.0
libtpu: 0.0.40
codegen_flags: <defaults>
</compile_context>

<pallas_src>
import jax
import jax.numpy as jnp
from jax.experimental import pallas as pl
from jax.experimental.pallas import tpu as pltpu


def _copy_kernel(x_ref, o_ref):
    # Identity copy of one lane-dense tile through VMEM.
    o_ref[...] = x_ref[...]


def _pick_view(n: int, b: int, c: int):
    """Pick a lane-dense 2D view (rows, cols) of the flat b*c elements.

    Prefers the widest cols that is a multiple of 128 and divides n, so the
    output stores are full unmasked `vst` (lane-dense out_spec is the biggest
    single lever for a bandwidth-bound copy).
    """
    if n % 128 == 0:
        for cols in (2048, 1024, 512, 256, 128):
            if n % cols == 0:
                return n // cols, cols
    # Fallback (tiny / oddly-shaped inputs, e.g. the (2, 4) example):
    # keep the natural (B, C) view and use a single full-array block.
    return b, c


def _pick_row_tile(rows: int, cols: int, itemsize: int) -> int:
    """Row tile sized so one block buffer is ~2 MiB.

    The pipeline keeps 2 input + 2 output buffers live (~8 MiB total), which
    is safe under the smallest default scoped-VMEM limit (v5e: 16 MiB, and
    only 32 MiB on v6e/v7x) while still large enough (>= 512 rows x 1024
    lanes f32) to reach ~85% of HBM roofline on a pure-bandwidth copy.
    """
    target_elems = (2 * 1024 * 1024) // max(itemsize, 1)
    tb = (target_elems // max(cols, 1)) // 8 * 8
    tb = max(tb, 8)
    if tb >= rows:
        return rows          # full extent: always a legal block dim
    return tb                # multiple of 8: legal sublane block dim


def sub_dim_layer(x: jax.Array) -> jax.Array:
    """Pallas implementation of SubDimLayer.forward.

    x: (B, C, 1, 1)  ->  returns (B, C), same dtype, same values.
    """
    assert x.ndim == 4 and x.shape[-1] == 1 and x.shape[-2] == 1, (
        "SubDimLayer expects trailing two dims of size 1"
    )
    b, c = x.shape[0], x.shape[1]
    n = b * c

    # Shape-only glue (the actual squeeze); pick a lane-dense layout for DMA.
    rows, cols = _pick_view(n, b, c)
    view = x.reshape(rows, cols)

    tb = _pick_row_tile(rows, cols, jnp.dtype(x.dtype).itemsize)
    grid = (pl.cdiv(rows, tb),)

    out = pl.pallas_call(
        _copy_kernel,
        out_shape=jax.ShapeDtypeStruct((rows, cols), x.dtype),
        grid=grid,
        in_specs=[pl.BlockSpec((tb, cols), lambda i: (i, 0))],
        out_specs=pl.BlockSpec((tb, cols), lambda i: (i, 0)),
        # Alias input 0 -> output 0: lets XLA treat the call as in-place and
        # avoid a second HBM slab / writeback stream for this pure copy.
        input_output_aliases={0: 0},
        compiler_params=pltpu.CompilerParams(
            dimension_semantics=("parallel",),
        ),
    )(view)

    return out.reshape(b, c)


if __name__ == "__main__":
    key = jax.random.PRNGKey(0)

    # Shape implied by the module: (B, C, 1, 1). Small test case.
    x = jax.random.normal(key, (2, 4, 1, 1), dtype=jnp.float32)
    y = sub_dim_layer(x)
    jax.block_until_ready(y)
    y_ref = jnp.squeeze(jnp.squeeze(x, axis=-1), axis=-1)
    assert y.shape == (2, 4), y.shape
    assert y.dtype == x.dtype
    assert jnp.array_equal(y, y_ref)

    # Second case exercising the lane-dense tiled path (cols multiple of 128).
    x2 = jax.random.normal(jax.random.PRNGKey(0), (8, 256, 1, 1),
                           dtype=jnp.float32)
    y2 = sub_dim_layer(x2)
    jax.block_until_ready(y2)
    y2_ref = jnp.squeeze(jnp.squeeze(x2, axis=-1), axis=-1)
    assert y2.shape == (8, 256), y2.shape
    assert jnp.array_equal(y2, y2_ref)

    # Third case: multi-tile grid path (rows > row tile), bf16 dtype.
    x3 = (jax.random.normal(jax.random.PRNGKey(0), (64, 4096, 1, 1),
                            dtype=jnp.float32)).astype(jnp.bfloat16)
    y3 = sub_dim_layer(x3)
    jax.block_until_ready(y3)
    y3_ref = jnp.squeeze(jnp.squeeze(x3, axis=-1), axis=-1)
    assert y3.shape == (64, 4096), y3.shape
    assert y3.dtype == x3.dtype
    assert jnp.array_equal(y3, y3_ref)

    print("KERNEL_OK")
</pallas_src>

<mosaic_0001>
module attributes {stable_mosaic.version = 11 : i64} {
  func.func @_copy_kernel(%arg0: i32, %arg1: memref<2x4xf32, #tpu.memory_space<vmem>>, %arg2: memref<2x4xf32, #tpu.memory_space<vmem>>) attributes {dimension_semantics = [#tpu.dimension_semantics<parallel>], iteration_bounds = array<i64: 1>, scalar_prefetch = 0 : i64, scratch_operands = 0 : i64, tpu.core_type = #tpu.core_type<tc>, window_params = [{transform_indices = @transform_0, window_bounds = array<i64: 2, 4>}, {transform_indices = @transform_1, window_bounds = array<i64: 2, 4>}]} {
    %c0 = arith.constant 0 : index
    %c0_0 = arith.constant 0 : index
    %0 = vector.load %arg1[%c0, %c0_0] : memref<2x4xf32, #tpu.memory_space<vmem>>, vector<2x4xf32>
    %c0_1 = arith.constant 0 : index
    %c0_2 = arith.constant 0 : index
    %1 = vector.load %arg2[%c0_1, %c0_2] : memref<2x4xf32, #tpu.memory_space<vmem>>, vector<2x4xf32>
    tpu.vector_store %arg2[%c0_1, %c0_2], %0 {strides = array<i32>} : memref<2x4xf32, #tpu.memory_space<vmem>>, vector<2x4xf32>,
    return
  }
  func.func @transform_0(%arg0: i32) -> (i32, i32) {
    %c0_i32 = arith.constant 0 : i32
    %c0_i32_0 = arith.constant 0 : i32
    return %arg0, %c0_i32 : i32, i32
  }
  func.func @transform_1(%arg0: i32) -> (i32, i32) {
    %c0_i32 = arith.constant 0 : i32
    %c0_i32_0 = arith.constant 0 : i32
    return %arg0, %c0_i32 : i32, i32
  }
}

</mosaic_0001>

<llo_original>
// kernel: tpu_custom_call.1
$region0: #{tpu_custom_call.1}
  #allocation0 [shape = 'u32[]', space=smem, size = 0x4, offset = 0x4, fixed_abs, tag = 'smem constant byte address 0x4 - core index']
  #allocation1 [shape = 'u32[144,128]{1,0:T(1,128)}', space=vmem, size = 0x12000, scoped, tag = 'internal scratch']
  %s0 = inlined_call_operand.hbm [shape: f32[2,4], index: 0, kind: input, shape index: {}, may-alias: {0,1}]
  %s1 = inlined_call_operand.hbm [shape: f32[2,4], index: 1, kind: output, shape index: {}, may-alias: {0,1}]
  %s2 = sld [smem:[#allocation0]]
  $region18: #{tpu_custom_call.1} parent=0
    _
  %s4 = ssub.s32 1, %s2
  %s5 = scalar_select 0, %s4, %s2
  $region1: #{tpu_custom_call.1} parent=0
    #allocation2 [shape = 'u8[1024]{0}', space=vmem, size = 0x400, scoped, tag = 'input window, operand 0, single buffered']
    #allocation3 [shape = 's32[1]{0}', space=sflag, size = 0x4, scoped, tag = 'scoped memory for tpu_custom_call.1']
    #allocation4 [shape = 's32[1]{0}', space=sflag, size = 0x4, scoped, tag = 'scoped memory for tpu_custom_call.1']
    #allocation5 [shape = 'u8[1024]{0}', space=vmem, size = 0x400, scoped, tag = 'output window, operand 0, single buffered']
    %6 = vsyncpa [#allocation3], 0
    %7 = vsyncpa [#allocation4], 0
    // Predicated region
    $region2: #{tpu_custom_call.1} parent=1 // pred_check
      _
    $region3: #{tpu_custom_call.1} parent=1 // pred_check_branch
      %9 = sbr.rel (0) target = $region5
    $region4: #{tpu_custom_call.1} parent=1 // pred_region
      %s11 = ssub.s32 32, 32
      %12 = vsyncadd [#allocation3], %s11
      %s14 = sshll.u32 [#allocation2], 4
      %s15 = int_to_ptr.vmem [resolvable:$true] %s14
      %17 = dma.hbm_to_vmem [thread:$0]  %s0, 32, %s15, [#allocation3]
    $region5: #{tpu_custom_call.1} parent=1 // pred_fallthru
      _
    // Predicated region
    $region6: #{tpu_custom_call.1} parent=1 // pred_check
      _
    $region7: #{tpu_custom_call.1} parent=1 // pred_check_branch
      %19 = sbr.rel (0) target = $region9
    $region8: #{tpu_custom_call.1} parent=1 // pred_region
      %20 = dma.done [#allocation3], 32
    $region9: #{tpu_custom_call.1} parent=1 // pred_fallthru
      _
    %v21 = vld [vmem:[#allocation2] sm:$0x3]
    %vm22 = vcmask 25600
    %23 = vst.msk [vmem:[#allocation5] sm:$0x3] %vm22, %v21
    // Predicated region
    $region10: #{tpu_custom_call.1} parent=1 // pred_check
      _
    $region11: #{tpu_custom_call.1} parent=1 // pred_check_branch
      %25 = sbr.rel (0) target = $region13
    $region12: #{tpu_custom_call.1} parent=1 // pred_region
      %s27 = ssub.s32 32, 32
      %28 = vsyncadd [#allocation4], %s27
      %s30 = sshll.u32 [#allocation5], 4
      %s31 = int_to_ptr.vmem [resolvable:$true] %s30
      %33 = dma.vmem_to_hbm [thread:$0]  %s31, 32, %s1, [#allocation4]
    $region13: #{tpu_custom_call.1} parent=1 // pred_fallthru
      _
    // Predicated region
    $region14: #{tpu_custom_call.1} parent=1 // pred_check
      _
    $region15: #{tpu_custom_call.1} parent=1 // pred_check_branch
      %35 = sbr.rel (0) target = $region17
    $region16: #{tpu_custom_call.1} parent=1 // pred_region
      %36 = dma.done [#allocation4], 32
    $region17: #{tpu_custom_call.1} parent=1 // pred_fallthru
      _
    %37 = vsyncpa [#allocation3], 1
    %38 = vsyncpa [#allocation4], 1

</llo_original>
